<compile_context>
chip_gen: v7x
topology: tpu7x:2x2x1
jax: 0.10.0
libtpu: 0.0.40
codegen_flags: <defaults>
</compile_context>

<pallas_src>
import functools

import jax
import jax.numpy as jnp
from jax.experimental import pallas as pl
from jax.experimental.pallas import tpu as pltpu

EPS = 1e-5
NEG_SLOPE = 0.01
LANE = 128
SUBLANE = 8


def _round_up(n, m):
    return ((n + m - 1) // m) * m


def _fcn4_kernel(x_ref,
                 w1_ref, g1_ref, bt1_ref,
                 w2_ref, g2_ref, bt2_ref,
                 w3_ref, g3_ref, bt3_ref,
                 w4_ref, b4_ref,
                 o_ref, *, batch_valid, mask_rows):
    inv_n = jnp.float32(1.0 / batch_valid)

    if mask_rows:
        row_ids = jax.lax.broadcasted_iota(jnp.int32, (x_ref.shape[0], 1), 0)
        row_mask = row_ids < batch_valid
    else:
        row_mask = None

    def lin_bn_act(h_bf16, w_ref, g_ref, bt_ref):
        # Linear on the MXU: bf16 operands, f32 accumulate. Bias dropped (BN cancels it).
        y = jnp.dot(h_bf16, w_ref[...], preferred_element_type=jnp.float32)
        # Single-pass training-mode BN stats (biased variance), per feature over the batch.
        s = jnp.sum(y, axis=0, keepdims=True)
        sq = jnp.sum(y * y, axis=0, keepdims=True)
        mean = s * inv_n
        var = jnp.maximum(sq * inv_n - mean * mean, 0.0)
        # Fold BN + affine into one scale/shift; rsqrt rides the EUP slot.
        a = g_ref[...] * jax.lax.rsqrt(var + EPS)
        c = bt_ref[...] - mean * a
        z = y * a + c
        # LeakyReLU (slope 0.01 < 1 => max form is exact).
        z = jnp.maximum(z, NEG_SLOPE * z)
        if row_mask is not None:
            # Keep zero-padded batch rows exactly zero so they never pollute later stats.
            z = jnp.where(row_mask, z, 0.0)
        return z.astype(jnp.bfloat16)

    h = x_ref[...]  # already bf16 (cast point is the wrapper)
    h = lin_bn_act(h, w1_ref, g1_ref, bt1_ref)
    h = lin_bn_act(h, w2_ref, g2_ref, bt2_ref)
    h = lin_bn_act(h, w3_ref, g3_ref, bt3_ref)
    out = jnp.dot(h, w4_ref[...], preferred_element_type=jnp.float32) + b4_ref[...]
    o_ref[...] = out.astype(o_ref.dtype)


def fcn_4_forward(x, params):
    """x: (B, in_features) float32. params: dict of weights (see init_params)."""
    B, d0 = x.shape
    d1 = params["w1"].shape[1]
    d2 = params["w2"].shape[1]
    d3 = params["w3"].shape[1]
    d4 = params["w4"].shape[1]

    Bp = _round_up(B, SUBLANE)
    p0, p1, p2, p3, p4 = (_round_up(d, LANE) for d in (d0, d1, d2, d3, d4))

    def pad2(a, r, c):
        return jnp.pad(a, ((0, r - a.shape[0]), (0, c - a.shape[1])))

    # Zero padding keeps math exact: padded input cols/weight rows contribute nothing,
    # padded gamma=0 forces padded features to exactly 0 after BN, padded w4 cols -> 0.
    x_p = pad2(x.astype(jnp.float32), Bp, p0).astype(jnp.bfloat16)
    w1 = pad2(params["w1"], p0, p1).astype(jnp.bfloat16)
    w2 = pad2(params["w2"], p1, p2).astype(jnp.bfloat16)
    w3 = pad2(params["w3"], p2, p3).astype(jnp.bfloat16)
    w4 = pad2(params["w4"], p3, p4).astype(jnp.bfloat16)
    g1, bt1 = pad2(params["g1"], 1, p1), pad2(params["bt1"], 1, p1)
    g2, bt2 = pad2(params["g2"], 1, p2), pad2(params["bt2"], 1, p2)
    g3, bt3 = pad2(params["g3"], 1, p3), pad2(params["bt3"], 1, p3)
    b4 = pad2(params["b4"], 1, p4)

    args = (x_p, w1, g1, bt1, w2, g2, bt2, w3, g3, bt3, w4, b4)

    # Cost + VMEM sizing hints.
    flops = 2 * Bp * (p0 * p1 + p1 * p2 + p2 * p3 + p3 * p4)
    transcendentals = p1 + p2 + p3  # one rsqrt per feature per BN layer
    in_bytes = int(sum(a.size * a.dtype.itemsize for a in args))
    out_bytes = Bp * p4 * 4
    cost = pl.CostEstimate(flops=flops, transcendentals=transcendentals,
                           bytes_accessed=in_bytes + out_bytes)
    act_bytes = 3 * Bp * max(p1, p2, p3) * 4  # live f32 activations upper bound
    vmem_limit = int(min(64 << 20, max(2 * (in_bytes + out_bytes) + act_bytes + (1 << 20),
                                       8 << 20)))

    kernel = functools.partial(_fcn4_kernel, batch_valid=B, mask_rows=(Bp != B))
    vmem_spec = pl.BlockSpec(memory_space=pltpu.MemorySpace.VMEM)
    out_p = pl.pallas_call(
        kernel,
        out_shape=jax.ShapeDtypeStruct((Bp, p4), jnp.float32),
        in_specs=[vmem_spec] * len(args),
        out_specs=vmem_spec,
        compiler_params=pltpu.CompilerParams(vmem_limit_bytes=vmem_limit),
        cost_estimate=cost,
    )(*args)
    return out_p[:B, :d4]


def init_params(key, in_features_num, class_num):
    """Deterministic synthetic init matching fcn_4.__init__ shapes.
    Linear weights stored as (in, out) = PyTorch weight.T; BN gamma=1, beta=0.
    b1..b3 are kept for the reference but dropped in the kernel (BN cancels them)."""
    dims = [in_features_num,
            in_features_num * 2,
            in_features_num * 4,
            in_features_num * 8,
            class_num]
    params = {}
    keys = jax.random.split(key, 8)
    for i in range(4):
        fan_in, fan_out = dims[i], dims[i + 1]
        bound = 1.0 / jnp.sqrt(fan_in)
        params[f"w{i+1}"] = jax.random.uniform(keys[2 * i], (fan_in, fan_out),
                                               minval=-bound, maxval=bound,
                                               dtype=jnp.float32)
        params[f"b{i+1}"] = jax.random.uniform(keys[2 * i + 1], (1, fan_out),
                                               minval=-bound, maxval=bound,
                                               dtype=jnp.float32)
        if i < 3:
            params[f"g{i+1}"] = jnp.ones((1, fan_out), jnp.float32)
            params[f"bt{i+1}"] = jnp.zeros((1, fan_out), jnp.float32)
    return params


def fcn_4_reference_f32(x, params):
    """Pure-JAX f32 reference of the PyTorch forward (training-mode BN, with biases)."""
    def lin_bn_act(h, w, b, g, bt):
        y = h @ w + b
        mean = jnp.mean(y, axis=0, keepdims=True)
        var = jnp.mean((y - mean) ** 2, axis=0, keepdims=True)
        y = (y - mean) / jnp.sqrt(var + EPS) * g + bt
        return jnp.where(y >= 0, y, NEG_SLOPE * y)

    h = lin_bn_act(x, params["w1"], params["b1"], params["g1"], params["bt1"])
    h = lin_bn_act(h, params["w2"], params["b2"], params["g2"], params["bt2"])
    h = lin_bn_act(h, params["w3"], params["b3"], params["g3"], params["bt3"])
    return h @ params["w4"] + params["b4"]


def fcn_4_reference_bf16(x, params):
    """Reference mirroring the kernel's numerics (bf16 MXU operands, f32 stats, no b1..b3)."""
    def lin_bn_act(h, w, g, bt):
        y = jnp.dot(h.astype(jnp.bfloat16), w.astype(jnp.bfloat16),
                    preferred_element_type=jnp.float32)
        n = y.shape[0]
        mean = jnp.sum(y, axis=0, keepdims=True) / n
        var = jnp.maximum(jnp.sum(y * y, axis=0, keepdims=True) / n - mean * mean, 0.0)
        a = g * jax.lax.rsqrt(var + EPS)
        c = bt - mean * a
        z = y * a + c
        return jnp.maximum(z, NEG_SLOPE * z)

    h = lin_bn_act(x, params["w1"], params["g1"], params["bt1"])
    h = lin_bn_act(h, params["w2"], params["g2"], params["bt2"])
    h = lin_bn_act(h, params["w3"], params["g3"], params["bt3"])
    return jnp.dot(h.astype(jnp.bfloat16), params["w4"].astype(jnp.bfloat16),
                   preferred_element_type=jnp.float32) + params["b4"]


if __name__ == "__main__":
    in_features_num = 32
    class_num = 10
    batch = 8

    key = jax.random.PRNGKey(0)
    k_x, k_p = jax.random.split(key)
    x = jax.random.normal(k_x, (batch, in_features_num), dtype=jnp.float32)
    params = init_params(k_p, in_features_num, class_num)

    out = jax.block_until_ready(fcn_4_forward(x, params))
    assert out.shape == (batch, class_num)

    ref_match = fcn_4_reference_bf16(x, params)   # same numerics as the kernel
    ref_f32 = fcn_4_reference_f32(x, params)      # PyTorch f32 semantics
    assert jnp.allclose(out, ref_match, atol=2e-3, rtol=2e-3), \
        "mismatch vs bf16-matched reference"
    assert jnp.allclose(out, ref_f32, atol=7e-2, rtol=7e-2), \
        "mismatch vs f32 PyTorch-semantics reference"
    print("KERNEL_OK")
</pallas_src>

<mosaic_0001>
module attributes {stable_mosaic.version = 11 : i64} {
  func.func @_fcn4_kernel(%arg0: memref<8x128xbf16, #tpu.memory_space<vmem>>, %arg1: memref<128x128xbf16, #tpu.memory_space<vmem>>, %arg2: memref<1x128xf32, #tpu.memory_space<vmem>>, %arg3: memref<1x128xf32, #tpu.memory_space<vmem>>, %arg4: memref<128x128xbf16, #tpu.memory_space<vmem>>, %arg5: memref<1x128xf32, #tpu.memory_space<vmem>>, %arg6: memref<1x128xf32, #tpu.memory_space<vmem>>, %arg7: memref<128x256xbf16, #tpu.memory_space<vmem>>, %arg8: memref<1x256xf32, #tpu.memory_space<vmem>>, %arg9: memref<1x256xf32, #tpu.memory_space<vmem>>, %arg10: memref<256x128xbf16, #tpu.memory_space<vmem>>, %arg11: memref<1x128xf32, #tpu.memory_space<vmem>>, %arg12: memref<8x128xf32, #tpu.memory_space<vmem>>) attributes {dimension_semantics = [], scalar_prefetch = 0 : i64, scratch_operands = 0 : i64, tpu.core_type = #tpu.core_type<tc>} {
    %c0 = arith.constant 0 : index
    %c0_0 = arith.constant 0 : index
    %0 = vector.load %arg0[%c0, %c0_0] : memref<8x128xbf16, #tpu.memory_space<vmem>>, vector<8x128xbf16>
    %c0_1 = arith.constant 0 : index
    %c0_2 = arith.constant 0 : index
    %1 = vector.load %arg1[%c0_1, %c0_2] : memref<128x128xbf16, #tpu.memory_space<vmem>>, vector<128x128xbf16>
    %cst = arith.constant dense<0.000000e+00> : vector<8x128xf32>
    %2 = tpu.matmul %0, %1, %cst {dimension_numbers = #tpu.dot_dimension_numbers<[1], [0], [0], [1], [0, 0, 1, 1], [], []>} : vector<8x128xbf16>, vector<128x128xbf16>, vector<8x128xf32> -> vector<8x128xf32>
    %cst_3 = arith.constant dense<0.000000e+00> : vector<128xf32>
    %3 = vector.multi_reduction <add>, %2, %cst_3 [0] : vector<8x128xf32> to vector<128xf32>
    %4 = vector.shape_cast %3 : vector<128xf32> to vector<1x128xf32>
    %5 = arith.mulf %2, %2 : vector<8x128xf32>
    %cst_4 = arith.constant dense<0.000000e+00> : vector<128xf32>
    %6 = vector.multi_reduction <add>, %5, %cst_4 [0] : vector<8x128xf32> to vector<128xf32>
    %7 = vector.shape_cast %6 : vector<128xf32> to vector<1x128xf32>
    %cst_5 = arith.constant 1.250000e-01 : f32
    %8 = vector.broadcast %cst_5 : f32 to vector<1x128xf32>
    %9 = arith.mulf %4, %8 : vector<1x128xf32>
    %cst_6 = arith.constant 1.250000e-01 : f32
    %10 = vector.broadcast %cst_6 : f32 to vector<1x128xf32>
    %11 = arith.mulf %7, %10 : vector<1x128xf32>
    %12 = arith.mulf %9, %9 : vector<1x128xf32>
    %13 = arith.subf %11, %12 : vector<1x128xf32>
    %cst_7 = arith.constant 0.000000e+00 : f32
    %14 = vector.broadcast %cst_7 : f32 to vector<1x128xf32>
    %15 = arith.maximumf %13, %14 : vector<1x128xf32>
    %c0_8 = arith.constant 0 : index
    %c0_9 = arith.constant 0 : index
    %16 = vector.load %arg2[%c0_8, %c0_9] : memref<1x128xf32, #tpu.memory_space<vmem>>, vector<1x128xf32>
    %cst_10 = arith.constant 9.99999974E-6 : f32
    %17 = vector.broadcast %cst_10 : f32 to vector<1x128xf32>
    %18 = arith.addf %15, %17 : vector<1x128xf32>
    %19 = math.rsqrt %18 : vector<1x128xf32>
    %20 = arith.mulf %16, %19 : vector<1x128xf32>
    %c0_11 = arith.constant 0 : index
    %c0_12 = arith.constant 0 : index
    %21 = vector.load %arg3[%c0_11, %c0_12] : memref<1x128xf32, #tpu.memory_space<vmem>>, vector<1x128xf32>
    %22 = arith.mulf %9, %20 : vector<1x128xf32>
    %23 = arith.subf %21, %22 : vector<1x128xf32>
    %24 = vector.broadcast %20 : vector<1x128xf32> to vector<8x128xf32>
    %25 = arith.mulf %2, %24 : vector<8x128xf32>
    %26 = vector.broadcast %23 : vector<1x128xf32> to vector<8x128xf32>
    %27 = arith.addf %25, %26 : vector<8x128xf32>
    %cst_13 = arith.constant 0.00999999977 : f32
    %28 = vector.broadcast %cst_13 : f32 to vector<8x128xf32>
    %29 = arith.mulf %28, %27 : vector<8x128xf32>
    %30 = arith.maximumf %27, %29 : vector<8x128xf32>
    %31 = arith.truncf %30 : vector<8x128xf32> to vector<8x128xbf16>
    %c0_14 = arith.constant 0 : index
    %c0_15 = arith.constant 0 : index
    %32 = vector.load %arg4[%c0_14, %c0_15] : memref<128x128xbf16, #tpu.memory_space<vmem>>, vector<128x128xbf16>
    %cst_16 = arith.constant dense<0.000000e+00> : vector<8x128xf32>
    %33 = tpu.matmul %31, %32, %cst_16 {dimension_numbers = #tpu.dot_dimension_numbers<[1], [0], [0], [1], [0, 0, 1, 1], [], []>} : vector<8x128xbf16>, vector<128x128xbf16>, vector<8x128xf32> -> vector<8x128xf32>
    %cst_17 = arith.constant dense<0.000000e+00> : vector<128xf32>
    %34 = vector.multi_reduction <add>, %33, %cst_17 [0] : vector<8x128xf32> to vector<128xf32>
    %35 = vector.shape_cast %34 : vector<128xf32> to vector<1x128xf32>
    %36 = arith.mulf %33, %33 : vector<8x128xf32>
    %cst_18 = arith.constant dense<0.000000e+00> : vector<128xf32>
    %37 = vector.multi_reduction <add>, %36, %cst_18 [0] : vector<8x128xf32> to vector<128xf32>
    %38 = vector.shape_cast %37 : vector<128xf32> to vector<1x128xf32>
    %cst_19 = arith.constant 1.250000e-01 : f32
    %39 = vector.broadcast %cst_19 : f32 to vector<1x128xf32>
    %40 = arith.mulf %35, %39 : vector<1x128xf32>
    %cst_20 = arith.constant 1.250000e-01 : f32
    %41 = vector.broadcast %cst_20 : f32 to vector<1x128xf32>
    %42 = arith.mulf %38, %41 : vector<1x128xf32>
    %43 = arith.mulf %40, %40 : vector<1x128xf32>
    %44 = arith.subf %42, %43 : vector<1x128xf32>
    %cst_21 = arith.constant 0.000000e+00 : f32
    %45 = vector.broadcast %cst_21 : f32 to vector<1x128xf32>
    %46 = arith.maximumf %44, %45 : vector<1x128xf32>
    %c0_22 = arith.constant 0 : index
    %c0_23 = arith.constant 0 : index
    %47 = vector.load %arg5[%c0_22, %c0_23] : memref<1x128xf32, #tpu.memory_space<vmem>>, vector<1x128xf32>
    %cst_24 = arith.constant 9.99999974E-6 : f32
    %48 = vector.broadcast %cst_24 : f32 to vector<1x128xf32>
    %49 = arith.addf %46, %48 : vector<1x128xf32>
    %50 = math.rsqrt %49 : vector<1x128xf32>
    %51 = arith.mulf %47, %50 : vector<1x128xf32>
    %c0_25 = arith.constant 0 : index
    %c0_26 = arith.constant 0 : index
    %52 = vector.load %arg6[%c0_25, %c0_26] : memref<1x128xf32, #tpu.memory_space<vmem>>, vector<1x128xf32>
    %53 = arith.mulf %40, %51 : vector<1x128xf32>
    %54 = arith.subf %52, %53 : vector<1x128xf32>
    %55 = vector.broadcast %51 : vector<1x128xf32> to vector<8x128xf32>
    %56 = arith.mulf %33, %55 : vector<8x128xf32>
    %57 = vector.broadcast %54 : vector<1x128xf32> to vector<8x128xf32>
    %58 = arith.addf %56, %57 : vector<8x128xf32>
    %cst_27 = arith.constant 0.00999999977 : f32
    %59 = vector.broadcast %cst_27 : f32 to vector<8x128xf32>
    %60 = arith.mulf %59, %58 : vector<8x128xf32>
    %61 = arith.maximumf %58, %60 : vector<8x128xf32>
    %62 = arith.truncf %61 : vector<8x128xf32> to vector<8x128xbf16>
    %c0_28 = arith.constant 0 : index
    %c0_29 = arith.constant 0 : index
    %63 = vector.load %arg7[%c0_28, %c0_29] : memref<128x256xbf16, #tpu.memory_space<vmem>>, vector<128x256xbf16>
    %cst_30 = arith.constant dense<0.000000e+00> : vector<8x256xf32>
    %64 = tpu.matmul %62, %63, %cst_30 {dimension_numbers = #tpu.dot_dimension_numbers<[1], [0], [0], [1], [0, 0, 1, 1], [], []>} : vector<8x128xbf16>, vector<128x256xbf16>, vector<8x256xf32> -> vector<8x256xf32>
    %cst_31 = arith.constant dense<0.000000e+00> : vector<256xf32>
    %65 = vector.multi_reduction <add>, %64, %cst_31 [0] : vector<8x256xf32> to vector<256xf32>
    %66 = vector.shape_cast %65 : vector<256xf32> to vector<1x256xf32>
    %67 = arith.mulf %64, %64 : vector<8x256xf32>
    %cst_32 = arith.constant dense<0.000000e+00> : vector<256xf32>
    %68 = vector.multi_reduction <add>, %67, %cst_32 [0] : vector<8x256xf32> to vector<256xf32>
    %69 = vector.shape_cast %68 : vector<256xf32> to vector<1x256xf32>
    %cst_33 = arith.constant 1.250000e-01 : f32
    %70 = vector.broadcast %cst_33 : f32 to vector<1x256xf32>
    %71 = arith.mulf %66, %70 : vector<1x256xf32>
    %cst_34 = arith.constant 1.250000e-01 : f32
    %72 = vector.broadcast %cst_34 : f32 to vector<1x256xf32>
    %73 = arith.mulf %69, %72 : vector<1x256xf32>
    %74 = arith.mulf %71, %71 : vector<1x256xf32>
    %75 = arith.subf %73, %74 : vector<1x256xf32>
    %cst_35 = arith.constant 0.000000e+00 : f32
    %76 = vector.broadcast %cst_35 : f32 to vector<1x256xf32>
    %77 = arith.maximumf %75, %76 : vector<1x256xf32>
    %c0_36 = arith.constant 0 : index
    %c0_37 = arith.constant 0 : index
    %78 = vector.load %arg8[%c0_36, %c0_37] : memref<1x256xf32, #tpu.memory_space<vmem>>, vector<1x256xf32>
    %cst_38 = arith.constant 9.99999974E-6 : f32
    %79 = vector.broadcast %cst_38 : f32 to vector<1x256xf32>
    %80 = arith.addf %77, %79 : vector<1x256xf32>
    %81 = math.rsqrt %80 : vector<1x256xf32>
    %82 = arith.mulf %78, %81 : vector<1x256xf32>
    %c0_39 = arith.constant 0 : index
    %c0_40 = arith.constant 0 : index
    %83 = vector.load %arg9[%c0_39, %c0_40] : memref<1x256xf32, #tpu.memory_space<vmem>>, vector<1x256xf32>
    %84 = arith.mulf %71, %82 : vector<1x256xf32>
    %85 = arith.subf %83, %84 : vector<1x256xf32>
    %86 = vector.broadcast %82 : vector<1x256xf32> to vector<8x256xf32>
    %87 = arith.mulf %64, %86 : vector<8x256xf32>
    %88 = vector.broadcast %85 : vector<1x256xf32> to vector<8x256xf32>
    %89 = arith.addf %87, %88 : vector<8x256xf32>
    %cst_41 = arith.constant 0.00999999977 : f32
    %90 = vector.broadcast %cst_41 : f32 to vector<8x256xf32>
    %91 = arith.mulf %90, %89 : vector<8x256xf32>
    %92 = arith.maximumf %89, %91 : vector<8x256xf32>
    %93 = arith.truncf %92 : vector<8x256xf32> to vector<8x256xbf16>
    %c0_42 = arith.constant 0 : index
    %c0_43 = arith.constant 0 : index
    %94 = vector.load %arg10[%c0_42, %c0_43] : memref<256x128xbf16, #tpu.memory_space<vmem>>, vector<256x128xbf16>
    %cst_44 = arith.constant dense<0.000000e+00> : vector<8x128xf32>
    %95 = tpu.matmul %93, %94, %cst_44 {dimension_numbers = #tpu.dot_dimension_numbers<[1], [0], [0], [1], [0, 0, 1, 1], [], []>} : vector<8x256xbf16>, vector<256x128xbf16>, vector<8x128xf32> -> vector<8x128xf32>
    %c0_45 = arith.constant 0 : index
    %c0_46 = arith.constant 0 : index
    %96 = vector.load %arg11[%c0_45, %c0_46] : memref<1x128xf32, #tpu.memory_space<vmem>>, vector<1x128xf32>
    %97 = vector.broadcast %96 : vector<1x128xf32> to vector<8x128xf32>
    %98 = arith.addf %95, %97 : vector<8x128xf32>
    %c0_47 = arith.constant 0 : index
    %c0_48 = arith.constant 0 : index
    %99 = vector.load %arg12[%c0_47, %c0_48] : memref<8x128xf32, #tpu.memory_space<vmem>>, vector<8x128xf32>
    tpu.vector_store %arg12[%c0_47, %c0_48], %98 {strides = array<i32>} : memref<8x128xf32, #tpu.memory_space<vmem>>, vector<8x128xf32>,
    return
  }
}

</mosaic_0001>

<llo_original>
// kernel: tpu_custom_call.1
$region0: #{tpu_custom_call.1}
  #allocation0 [shape = 'u32[]', space=smem, size = 0x4, offset = 0x4, fixed_abs, tag = 'smem constant byte address 0x4 - core index']
  #allocation1 [shape = 'u32[144,128]{1,0:T(1,128)}', space=vmem, size = 0x12000, scoped, tag = 'internal scratch']
  %s0 = inlined_call_operand.hbm [shape: bf16[8,128], index: 0, kind: input, shape index: {}]
  %s1 = inlined_call_operand.hbm [shape: bf16[128,128], index: 1, kind: input, shape index: {}]
  %s2 = inlined_call_operand.vmem [shape: f32[1,128], index: 2, kind: input, shape index: {}]
  %s3 = inlined_call_operand.vmem [shape: f32[1,128], index: 3, kind: input, shape index: {}]
  %s4 = inlined_call_operand.hbm [shape: bf16[128,128], index: 4, kind: input, shape index: {}]
  %s5 = inlined_call_operand.vmem [shape: f32[1,128], index: 5, kind: input, shape index: {}]
  %s6 = inlined_call_operand.vmem [shape: f32[1,128], index: 6, kind: input, shape index: {}]
  %s7 = inlined_call_operand.hbm [shape: bf16[128,256], index: 7, kind: input, shape index: {}]
  %s8 = inlined_call_operand.vmem [shape: f32[1,256], index: 8, kind: input, shape index: {}]
  %s9 = inlined_call_operand.vmem [shape: f32[1,256], index: 9, kind: input, shape index: {}]
  %s10 = inlined_call_operand.hbm [shape: bf16[256,128], index: 10, kind: input, shape index: {}]
  %s11 = inlined_call_operand.vmem [shape: f32[1,128], index: 11, kind: input, shape index: {}]
  %s12 = inlined_call_operand.hbm [shape: f32[8,128], index: 12, kind: output, shape index: {}]
  %s13 = sld [smem:[#allocation0]]
  $region78: #{tpu_custom_call.1} parent=0
    _
  %s15 = ssub.s32 1, %s13
  %s16 = scalar_select 0, %s15, %s13
  $region1: #{tpu_custom_call.1} parent=0
    #allocation2 [shape = 'u8[2048]{0}', space=vmem, size = 0x800, scoped, tag = 'input window, operand 0, single buffered']
    #allocation3 [shape = 's32[1]{0}', space=sflag, size = 0x4, scoped, tag = 'scoped memory for tpu_custom_call.1']
    #allocation4 [shape = 's32[1]{0}', space=sflag, size = 0x4, scoped, tag = 'scoped memory for tpu_custom_call.1']
    #allocation5 [shape = 'u8[32768]{0}', space=vmem, size = 0x8000, scoped, tag = 'input window, operand 1, single buffered']
    #allocation6 [shape = 's32[1]{0}', space=sflag, size = 0x4, scoped, tag = 'scoped memory for tpu_custom_call.1']
    #allocation7 [shape = 'u8[32768]{0}', space=vmem, size = 0x8000, scoped, tag = 'input window, operand 4, single buffered']
    #allocation8 [shape = 'u8[65536]{0}', space=vmem, size = 0x10000, scoped, tag = 'input window, operand 7, single buffered']
    #allocation9 [shape = 's32[1]{0}', space=sflag, size = 0x4, scoped, tag = 'scoped memory for tpu_custom_call.1']
    #allocation10 [shape = 'u8[65536]{0}', space=vmem, size = 0x10000, scoped, tag = 'input window, operand 10, single buffered']
    #allocation11 [shape = 'u8[4096]{0}', space=vmem, size = 0x1000, scoped, tag = 'output window, operand 0, single buffered']
    %17 = vsyncpa [#allocation3], 0
    %18 = vsyncpa [#allocation6], 0
    %19 = vsyncpa [#allocation9], 0
    %20 = vsyncpa [#allocation4], 0
    // Predicated region
    $region2: #{tpu_custom_call.1} parent=1 // pred_check
      _
    $region3: #{tpu_custom_call.1} parent=1 // pred_check_branch
      %22 = sbr.rel (0) target = $region5
    $region4: #{tpu_custom_call.1} parent=1 // pred_region
      %s24 = ssub.s32 64, 64
      %25 = vsyncadd [#allocation3], %s24
      %s27 = sshll.u32 [#allocation2], 4
      %s28 = int_to_ptr.vmem [resolvable:$true] %s27
      %30 = dma.hbm_to_vmem [thread:$0]  %s0, 64, %s28, [#allocation3]
    $region5: #{tpu_custom_call.1} parent=1 // pred_fallthru
      _
    // Predicated region
    $region6: #{tpu_custom_call.1} parent=1 // pred_check
      _
    $region7: #{tpu_custom_call.1} parent=1 // pred_check_branch
      %32 = sbr.rel (0) target = $region9
    $region8: #{tpu_custom_call.1} parent=1 // pred_region
      %s34 = ssub.s32 1024, 1024
      %35 = vsyncadd [#allocation6], %s34
      %s36 = sshll.u32 [#allocation5], 4
      %s37 = int_to_ptr.vmem [resolvable:$true] %s36
      %42 = dma.hbm_to_vmem [thread:$0]  %s1, 1024, %s37, [#allocation6], 64, 64, 4
    $region9: #{tpu_custom_call.1} parent=1 // pred_fallthru
      _
    // Predicated region
    $region10: #{tpu_custom_call.1} parent=1 // pred_check
      _
    $region11: #{tpu_custom_call.1} parent=1 // pred_check_branch
      %44 = sbr.rel (0) target = $region13
    $region12: #{tpu_custom_call.1} parent=1 // pred_region
      _
    $region13: #{tpu_custom_call.1} parent=1 // pred_fallthru
      _
    // Predicated region
    $region14: #{tpu_custom_call.1} parent=1 // pred_check
      _
    $region15: #{tpu_custom_call.1} parent=1 // pred_check_branch
      %46 = sbr.rel (0) target = $region17
    $region16: #{tpu_custom_call.1} parent=1 // pred_region
      _
    $region17: #{tpu_custom_call.1} parent=1 // pred_fallthru
      _
    // Predicated region
    $region18: #{tpu_custom_call.1} parent=1 // pred_check
      _
    $region19: #{tpu_custom_call.1} parent=1 // pred_check_branch
      %48 = sbr.rel (0) target = $region21
    $region20: #{tpu_custom_call.1} parent=1 // pred_region
      %s50 = ssub.s32 1024, 1024
      %51 = vsyncadd [#allocation6], %s50
      %s52 = sshll.u32 [#allocation7], 4
      %s53 = int_to_ptr.vmem [resolvable:$true] %s52
      %58 = dma.hbm_to_vmem [thread:$0]  %s4, 1024, %s53, [#allocation6], 64, 64, 4
    $region21: #{tpu_custom_call.1} parent=1 // pred_fallthru
      _
    // Predicated region
    $region22: #{tpu_custom_call.1} parent=1 // pred_check
      _
    $region23: #{tpu_custom_call.1} parent=1 // pred_check_branch
      %60 = sbr.rel (0) target = $region25
    $region24: #{tpu_custom_call.1} parent=1 // pred_region
      _
    $region25: #{tpu_custom_call.1} parent=1 // pred_fallthru
      _
    // Predicated region
    $region26: #{tpu_custom_call.1} parent=1 // pred_check
      _
    $region27: #{tpu_custom_call.1} parent=1 // pred_check_branch
      %62 = sbr.rel (0) target = $region29
    $region28: #{tpu_custom_call.1} parent=1 // pred_region
      _
    $region29: #{tpu_custom_call.1} parent=1 // pred_fallthru
      _
    // Predicated region
    $region30: #{tpu_custom_call.1} parent=1 // pred_check
      _
    $region31: #{tpu_custom_call.1} parent=1 // pred_check_branch
      %64 = sbr.rel (0) target = $region33
    $region32: #{tpu_custom_call.1} parent=1 // pred_region
      %s66 = ssub.s32 2048, 2048
      %67 = vsyncadd [#allocation9], %s66
      %s68 = sshll.u32 [#allocation8], 4
      %s69 = int_to_ptr.vmem [resolvable:$true] %s68
      %74 = dma.hbm_to_vmem [thread:$0]  %s7, 2048, %s69, [#allocation9], 128, 128, 8
    $region33: #{tpu_custom_call.1} parent=1 // pred_fallthru
      _
    // Predicated region
    $region34: #{tpu_custom_call.1} parent=1 // pred_check
      _
    $region35: #{tpu_custom_call.1} parent=1 // pred_check_branch
      %76 = sbr.rel (0) target = $region37
    $region36: #{tpu_custom_call.1} parent=1 // pred_region
      _
    $region37: #{tpu_custom_call.1} parent=1 // pred_fallthru
      _
    // Predicated region
    $region38: #{tpu_custom_call.1} parent=1 // pred_check
      _
    $region39: #{tpu_custom_call.1} parent=1 // pred_check_branch
      %78 = sbr.rel (0) target = $region41
    $region40: #{tpu_custom_call.1} parent=1 // pred_region
      _
    $region41: #{tpu_custom_call.1} parent=1 // pred_fallthru
      _
    // Predicated region
    $region42: #{tpu_custom_call.1} parent=1 // pred_check
      _
    $region43: #{tpu_custom_call.1} parent=1 // pred_check_branch
      %80 = sbr.rel (0) target = $region45
    $region44: #{tpu_custom_call.1} parent=1 // pred_region
      %s82 = ssub.s32 2048, 2048
      %83 = vsyncadd [#allocation9], %s82
      %s84 = sshll.u32 [#allocation10], 4
      %s85 = int_to_ptr.vmem [resolvable:$true] %s84
      %90 = dma.hbm_to_vmem [thread:$0]  %s10, 2048, %s85, [#allocation9], 64, 64, 4
    $region45: #{tpu_custom_call.1} parent=1 // pred_fallthru
      _
    // Predicated region
    $region46: #{tpu_custom_call.1} parent=1 // pred_check
      _
    $region47: #{tpu_custom_call.1} parent=1 // pred_check_branch
      %92 = sbr.rel (0) target = $region49
    $region48: #{tpu_custom_call.1} parent=1 // pred_region
      _
    $region49: #{tpu_custom_call.1} parent=1 // pred_fallthru
      _
    // Predicated region
    $region50: #{tpu_custom_call.1} parent=1 // pred_check
      _
    $region51: #{tpu_custom_call.1} parent=1 // pred_check_branch
      %94 = sbr.rel (0) target = $region53
    $region52: #{tpu_custom_call.1} parent=1 // pred_region
      %95 = dma.done [#allocation3], 64
    $region53: #{tpu_custom_call.1} parent=1 // pred_fallthru
      _
    // Predicated region
    $region54: #{tpu_custom_call.1} parent=1 // pred_check
      _
    $region55: #{tpu_custom_call.1} parent=1 // pred_check_branch
      %97 = sbr.rel (0) target = $region57
    $region56: #{tpu_custom_call.1} parent=1 // pred_region
      %98 = dma.done [#allocation6], 1024
    $region57: #{tpu_custom_call.1} parent=1 // pred_fallthru
      _
    // Predicated region
    $region58: #{tpu_custom_call.1} parent=1 // pred_check
      _
    $region59: #{tpu_custom_call.1} parent=1 // pred_check_branch
      %100 = sbr.rel (0) target = $region61
    $region60: #{tpu_custom_call.1} parent=1 // pred_region
      %101 = dma.done [#allocation6], 1024
    $region61: #{tpu_custom_call.1} parent=1 // pred_fallthru
      _
    // Predicated region
    $region62: #{tpu_custom_call.1} parent=1 // pred_check
      _
    $region63: #{tpu_custom_call.1} parent=1 // pred_check_branch
      %103 = sbr.rel (0) target = $region65
    $region64: #{tpu_custom_call.1} parent=1 // pred_region
      %104 = dma.done [#allocation9], 2048
    $region65: #{tpu_custom_call.1} parent=1 // pred_fallthru
      _
    // Predicated region
    $region66: #{tpu_custom_call.1} parent=1 // pred_check
      _
    $region67: #{tpu_custom_call.1} parent=1 // pred_check_branch
      %106 = sbr.rel (0) target = $region69
    $region68: #{tpu_custom_call.1} parent=1 // pred_region
      %107 = dma.done [#allocation9], 2048
    $region69: #{tpu_custom_call.1} parent=1 // pred_fallthru
      _
    %v109 = vld [vmem:[#allocation2] sm:$0xf]
    %v110 = vld [vmem:[#allocation5] sm:$0xf]
    %v111 = vld [vmem:[#allocation5 + $0x4] sm:$0xf]
    %v112 = vld [vmem:[#allocation5 + $0x8] sm:$0xf]
    %v113 = vld [vmem:[#allocation5 + $0xc] sm:$0xf]
    %v114 = vld [vmem:[#allocation5 + $0x10] sm:$0xf]
    %v115 = vld [vmem:[#allocation5 + $0x14] sm:$0xf]
    %v116 = vld [vmem:[#allocation5 + $0x18] sm:$0xf]
    %v117 = vld [vmem:[#allocation5 + $0x1c] sm:$0xf]
    %v118 = vld [vmem:[#allocation5 + $0x20] sm:$0xf]
    %v119 = vld [vmem:[#allocation5 + $0x24] sm:$0xf]
    %v120 = vld [vmem:[#allocation5 + $0x28] sm:$0xf]
    %v121 = vld [vmem:[#allocation5 + $0x2c] sm:$0xf]
    %v122 = vld [vmem:[#allocation5 + $0x30] sm:$0xf]
    %v123 = vld [vmem:[#allocation5 + $0x34] sm:$0xf]
    %v124 = vld [vmem:[#allocation5 + $0x38] sm:$0xf]
    %v125 = vld [vmem:[#allocation5 + $0x3c] sm:$0xf]
    %v142 = vunpack.c.l.b16 %v110
    %v143 = vunpack.c.l.b16 %v111
    %v144 = vunpack.c.l.b16 %v112
    %v145 = vunpack.c.l.b16 %v113
    %v146 = vunpack.c.l.b16 %v114
    %v147 = vunpack.c.l.b16 %v115
    %v148 = vunpack.c.l.b16 %v116
    %v149 = vunpack.c.l.b16 %v117
    %v150 = vunpack.c.l.b16 %v118
    %v151 = vunpack.c.l.b16 %v119
    %v152 = vunpack.c.l.b16 %v120
    %v153 = vunpack.c.l.b16 %v121
    %v154 = vunpack.c.l.b16 %v122
    %v155 = vunpack.c.l.b16 %v123
    %v156 = vunpack.c.l.b16 %v124
    %v157 = vunpack.c.l.b16 %v125
    %v158 = vpack.c.b16 %v143, %v142
    %v159 = vpack.c.b16 %v145, %v144
    %v160 = vpack.c.b16 %v147, %v146
    %v161 = vpack.c.b16 %v149, %v148
    %v162 = vpack.c.b16 %v151, %v150
    %v163 = vpack.c.b16 %v153, %v152
    %v164 = vpack.c.b16 %v155, %v154
    %v165 = vpack.c.b16 %v157, %v156
    %174 = vmatprep.subr.bf16.mxu0 0
    %175 = vmatpush1.bf16.msra.mxu0 %v158
    %176 = vmatprep.subr.bf16.mxu0 0
    %177 = vmatpush1.bf16.msra.mxu0 %v159
    %178 = vmatprep.subr.bf16.mxu0 0
    %179 = vmatpush1.bf16.msra.mxu0 %v160
    %180 = vmatprep.subr.bf16.mxu0 0
    %181 = vmatpush1.bf16.msra.mxu0 %v161
    %182 = vmatprep.subr.bf16.mxu0 0
    %183 = vmatpush1.bf16.msra.mxu0 %v162
    %184 = vmatprep.subr.bf16.mxu0 0
    %185 = vmatpush1.bf16.msra.mxu0 %v163
    %186 = vmatprep.subr.bf16.mxu0 0
    %187 = vmatpush1.bf16.msra.mxu0 %v164
    %188 = vmatprep.subr.bf16.mxu0 0
    %189 = vmatpush1.bf16.msra.mxu0 %v165
    %190 = vmatprep.subr.bf16.mxu0 0
    %191 = vmatpush1.bf16.msra.mxu0 0
    %192 = vmatprep.subr.bf16.mxu0 0
    %193 = vmatpush1.bf16.msra.mxu0 0
    %194 = vmatprep.subr.bf16.mxu0 0
    %195 = vmatpush1.bf16.msra.mxu0 0
    %196 = vmatprep.subr.bf16.mxu0 0
    %197 = vmatpush1.bf16.msra.mxu0 0
    %198 = vmatprep.subr.bf16.mxu0 0
    %199 = vmatpush1.bf16.msra.mxu0 0
    %200 = vmatprep.subr.bf16.mxu0 0
    %201 = vmatpush1.bf16.msra.mxu0 0
    %202 = vmatprep.subr.bf16.mxu0 0
    %203 = vmatpush1.bf16.msra.mxu0 0
    %204 = vmatprep.subr.bf16.mxu0 0
    %205 = vmatpush1.bf16.msra.mxu0 0
    %206 = vmatprep.mubr.bf16.mxu0 0
    %207 = vmatmul.mubr.bf16.gmra.mrb[0].mxu0 %v109
    %v208 = vpop.f32.mrb[0].mxu0
    %v209 = vadd.f32 0.0, %v208
    %v210 = vpop.f32.mrb[0].mxu0
    %v211 = vpop.f32.mrb[0].mxu0
    %v212 = vpop.f32.mrb[0].mxu0
    %213 = vdwg.mxu0
    %v214 = vrot.slane %v209, 4
    %v215 = vadd.f32 %v209, %v214
    %v216 = vrot.slane %v215, 2
    %v217 = vadd.f32 %v215, %v216
    %v218 = vrot.slane %v217, 1
    %v219 = vadd.f32 %v217, %v218
    %v220 = vmul.f32 %v209, %v209
    %v221 = vrot.slane %v220, 4
    %v222 = vadd.f32 %v220, %v221
    %v223 = vrot.slane %v222, 2
    %v224 = vadd.f32 %v222, %v223
    %v225 = vrot.slane %v224, 1
    %v226 = vadd.f32 %v224, %v225
    %v227 = vmul.f32 %v219, 0.125
    %v228 = vmul.f32 %v226, 0.125
    %v229 = vmul.f32 %v227, %v227
    %v230 = vsub.f32 %v228, %v229
    %v231 = vmax.f32 %v230, 0.0
    %v232 = vld [vmem:[%s2] sm:$0x1]
    %v233 = vadd.f32 %v231, 1e-05
    %v234 = vrsqrt.pop %v233
    %v235 = vmul.f32 %v232, %v234
    %v236 = vld [vmem:[%s3] sm:$0x1]
    %v237 = vmul.f32 %v227, %v235
    %v238 = vsub.f32 %v236, %v237
    %v240 = vlaneseq
    %v241 = vshrl.u32 %v240, 7
    %v242 = vsub.s32 0, %v241
    %v243 = vrot.slane %v235, %v242
    %v245 = vmul.f32 %v209, %v243
    %v247 = vlaneseq
    %v248 = vshrl.u32 %v247, 7
    %v249 = vsub.s32 0, %v248
    %v250 = vrot.slane %v238, %v249
    %v252 = vadd.f32 %v245, %v250
    %v253 = vmul.f32 %v252, 0.01
    %v254 = vmax.f32 %v252, %v253
    %v255 = vpack.c.bf16 %v254, %v254
    %v256 = vld [vmem:[#allocation7] sm:$0xf]
    %v257 = vld [vmem:[#allocation7 + $0x4] sm:$0xf]
    %v258 = vld [vmem:[#allocation7 + $0x8] sm:$0xf]
    %v259 = vld [vmem:[#allocation7 + $0xc] sm:$0xf]
    %v260 = vld [vmem:[#allocation7 + $0x10] sm:$0xf]
    %v261 = vld [vmem:[#allocation7 + $0x14] sm:$0xf]
    %v262 = vld [vmem:[#allocation7 + $0x18] sm:$0xf]
    %v263 = vld [vmem:[#allocation7 + $0x1c] sm:$0xf]
    %v264 = vld [vmem:[#allocation7 + $0x20] sm:$0xf]
    %v265 = vld [vmem:[#allocation7 + $0x24] sm:$0xf]
    %v266 = vld [vmem:[#allocation7 + $0x28] sm:$0xf]
    %v267 = vld [vmem:[#allocation7 + $0x2c] sm:$0xf]
    %v268 = vld [vmem:[#allocation7 + $0x30] sm:$0xf]
    %v269 = vld [vmem:[#allocation7 + $0x34] sm:$0xf]
    %v270 = vld [vmem:[#allocation7 + $0x38] sm:$0xf]
    %v271 = vld [vmem:[#allocation7 + $0x3c] sm:$0xf]
    %v288 = vunpack.c.l.b16 %v256
    %v289 = vunpack.c.l.b16 %v257
    %v290 = vunpack.c.l.b16 %v258
    %v291 = vunpack.c.l.b16 %v259
    %v292 = vunpack.c.l.b16 %v260
    %v293 = vunpack.c.l.b16 %v261
    %v294 = vunpack.c.l.b16 %v262
    %v295 = vunpack.c.l.b16 %v263
    %v296 = vunpack.c.l.b16 %v264
    %v297 = vunpack.c.l.b16 %v265
    %v298 = vunpack.c.l.b16 %v266
    %v299 = vunpack.c.l.b16 %v267
    %v300 = vunpack.c.l.b16 %v268
    %v301 = vunpack.c.l.b16 %v269
    %v302 = vunpack.c.l.b16 %v270
    %v303 = vunpack.c.l.b16 %v271
    %v304 = vpack.c.b16 %v289, %v288
    %v305 = vpack.c.b16 %v291, %v290
    %v306 = vpack.c.b16 %v293, %v292
    %v307 = vpack.c.b16 %v295, %v294
    %v308 = vpack.c.b16 %v297, %v296
    %v309 = vpack.c.b16 %v299, %v298
    %v310 = vpack.c.b16 %v301, %v300
    %v311 = vpack.c.b16 %v303, %v302
    %320 = vmatprep.subr.bf16.mxu0 0
    %321 = vmatpush1.bf16.msra.mxu0 %v304
    %322 = vmatprep.subr.bf16.mxu0 0
    %323 = vmatpush1.bf16.msra.mxu0 %v305
    %324 = vmatprep.subr.bf16.mxu0 0
    %325 = vmatpush1.bf16.msra.mxu0 %v306
    %326 = vmatprep.subr.bf16.mxu0 0
    %327 = vmatpush1.bf16.msra.mxu0 %v307
    %328 = vmatprep.subr.bf16.mxu0 0
    %329 = vmatpush1.bf16.msra.mxu0 %v308
    %330 = vmatprep.subr.bf16.mxu0 0
    %331 = vmatpush1.bf16.msra.mxu0 %v309
    %332 = vmatprep.subr.bf16.mxu0 0
    %333 = vmatpush1.bf16.msra.mxu0 %v310
    %334 = vmatprep.subr.bf16.mxu0 0
    %335 = vmatpush1.bf16.msra.mxu0 %v311
    %336 = vmatprep.subr.bf16.mxu0 0
    %337 = vmatpush1.bf16.msra.mxu0 0
    %338 = vmatprep.subr.bf16.mxu0 0
    %339 = vmatpush1.bf16.msra.mxu0 0
    %340 = vmatprep.subr.bf16.mxu0 0
    %341 = vmatpush1.bf16.msra.mxu0 0
    %342 = vmatprep.subr.bf16.mxu0 0
    %343 = vmatpush1.bf16.msra.mxu0 0
    %344 = vmatprep.subr.bf16.mxu0 0
    %345 = vmatpush1.bf16.msra.mxu0 0
    %346 = vmatprep.subr.bf16.mxu0 0
    %347 = vmatpush1.bf16.msra.mxu0 0
    %348 = vmatprep.subr.bf16.mxu0 0
    %349 = vmatpush1.bf16.msra.mxu0 0
    %350 = vmatprep.subr.bf16.mxu0 0
    %351 = vmatpush1.bf16.msra.mxu0 0
    %352 = vmatprep.mubr.bf16.mxu0 0
    %353 = vmatmul.mubr.bf16.gmra.mrb[0].mxu0 %v255
    %v354 = vpop.f32.mrb[0].mxu0
    %v355 = vadd.f32 0.0, %v354
    %v356 = vpop.f32.mrb[0].mxu0
    %v357 = vpop.f32.mrb[0].mxu0
    %v358 = vpop.f32.mrb[0].mxu0
    %359 = vdwg.mxu0
    %v360 = vrot.slane %v355, 4
    %v361 = vadd.f32 %v355, %v360
    %v362 = vrot.slane %v361, 2
    %v363 = vadd.f32 %v361, %v362
    %v364 = vrot.slane %v363, 1
    %v365 = vadd.f32 %v363, %v364
    %v366 = vmul.f32 %v355, %v355
    %v367 = vrot.slane %v366, 4
    %v368 = vadd.f32 %v366, %v367
    %v369 = vrot.slane %v368, 2
    %v370 = vadd.f32 %v368, %v369
    %v371 = vrot.slane %v370, 1
    %v372 = vadd.f32 %v370, %v371
    %v373 = vmul.f32 %v365, 0.125
    %v374 = vmul.f32 %v372, 0.125
    %v375 = vmul.f32 %v373, %v373
    %v376 = vsub.f32 %v374, %v375
    %v377 = vmax.f32 %v376, 0.0
    %v378 = vld [vmem:[%s5] sm:$0x1]
    %v379 = vadd.f32 %v377, 1e-05
    %v380 = vrsqrt.pop %v379
    %v381 = vmul.f32 %v378, %v380
    %v382 = vld [vmem:[%s6] sm:$0x1]
    %v383 = vmul.f32 %v373, %v381
    %v384 = vsub.f32 %v382, %v383
    %v386 = vlaneseq
    %v387 = vshrl.u32 %v386, 7
    %v388 = vsub.s32 0, %v387
    %v389 = vrot.slane %v381, %v388
    %v391 = vmul.f32 %v355, %v389
    %v393 = vlaneseq
    %v394 = vshrl.u32 %v393, 7
    %v395 = vsub.s32 0, %v394
    %v396 = vrot.slane %v384, %v395
    %v398 = vadd.f32 %v391, %v396
    %v399 = vmul.f32 %v398, 0.01
    %v400 = vmax.f32 %v398, %v399
    %v401 = vpack.c.bf16 %v400, %v400
    %v402 = vld [vmem:[#allocation8] sm:$0xff]
    %v403 = vld [vmem:[#allocation8 + $0x8] sm:$0xff]
    %v404 = vld [vmem:[#allocation8 + $0x10] sm:$0xff]
    %v405 = vld [vmem:[#allocation8 + $0x18] sm:$0xff]
    %v406 = vld [vmem:[#allocation8 + $0x20] sm:$0xff]
    %v407 = vld [vmem:[#allocation8 + $0x28] sm:$0xff]
    %v408 = vld [vmem:[#allocation8 + $0x30] sm:$0xff]
    %v409 = vld [vmem:[#allocation8 + $0x38] sm:$0xff]
    %v410 = vld [vmem:[#allocation8 + $0x40] sm:$0xff]
    %v411 = vld [vmem:[#allocation8 + $0x48] sm:$0xff]
    %v412 = vld [vmem:[#allocation8 + $0x50] sm:$0xff]
    %v413 = vld [vmem:[#allocation8 + $0x58] sm:$0xff]
    %v414 = vld [vmem:[#allocation8 + $0x60] sm:$0xff]
    %v415 = vld [vmem:[#allocation8 + $0x68] sm:$0xff]
    %v416 = vld [vmem:[#allocation8 + $0x70] sm:$0xff]
    %v417 = vld [vmem:[#allocation8 + $0x78] sm:$0xff]
    %v434 = vunpack.c.l.b16 %v402
    %v435 = vunpack.c.h.b16 %v402
    %v436 = vunpack.c.l.b16 %v403
    %v437 = vunpack.c.h.b16 %v403
    %v438 = vunpack.c.l.b16 %v404
    %v439 = vunpack.c.h.b16 %v404
    %v440 = vunpack.c.l.b16 %v405
    %v441 = vunpack.c.h.b16 %v405
    %v442 = vunpack.c.l.b16 %v406
    %v443 = vunpack.c.h.b16 %v406
    %v444 = vunpack.c.l.b16 %v407
    %v445 = vunpack.c.h.b16 %v407
    %v446 = vunpack.c.l.b16 %v408
    %v447 = vunpack.c.h.b16 %v408
    %v448 = vunpack.c.l.b16 %v409
    %v449 = vunpack.c.h.b16 %v409
    %v450 = vunpack.c.l.b16 %v410
    %v451 = vunpack.c.h.b16 %v410
    %v452 = vunpack.c.l.b16 %v411
    %v453 = vunpack.c.h.b16 %v411
    %v454 = vunpack.c.l.b16 %v412
    %v455 = vunpack.c.h.b16 %v412
    %v456 = vunpack.c.l.b16 %v413
    %v457 = vunpack.c.h.b16 %v413
    %v458 = vunpack.c.l.b16 %v414
    %v459 = vunpack.c.h.b16 %v414
    %v460 = vunpack.c.l.b16 %v415
    %v461 = vunpack.c.h.b16 %v415
    %v462 = vunpack.c.l.b16 %v416
    %v463 = vunpack.c.h.b16 %v416
    %v464 = vunpack.c.l.b16 %v417
    %v465 = vunpack.c.h.b16 %v417
    %v466 = vpack.c.b16 %v436, %v434
    %v467 = vpack.c.b16 %v437, %v435
    %v468 = vpack.c.b16 %v440, %v438
    %v469 = vpack.c.b16 %v441, %v439
    %v470 = vpack.c.b16 %v444, %v442
    %v471 = vpack.c.b16 %v445, %v443
    %v472 = vpack.c.b16 %v448, %v446
    %v473 = vpack.c.b16 %v449, %v447
    %v474 = vpack.c.b16 %v452, %v450
    %v475 = vpack.c.b16 %v453, %v451
    %v476 = vpack.c.b16 %v456, %v454
    %v477 = vpack.c.b16 %v457, %v455
    %v478 = vpack.c.b16 %v460, %v458
    %v479 = vpack.c.b16 %v461, %v459
    %v480 = vpack.c.b16 %v464, %v462
    %v481 = vpack.c.b16 %v465, %v463
    %498 = vmatprep.subr.bf16.mxu0 %v467
    %499 = vmatpush1.bf16.msra.mxu0 %v466
    %500 = vmatprep.subr.bf16.mxu0 %v469
    %501 = vmatpush1.bf16.msra.mxu0 %v468
    %502 = vmatprep.subr.bf16.mxu0 %v471
    %503 = vmatpush1.bf16.msra.mxu0 %v470
    %504 = vmatprep.subr.bf16.mxu0 %v473
    %505 = vmatpush1.bf16.msra.mxu0 %v472
    %506 = vmatprep.subr.bf16.mxu0 %v475
    %507 = vmatpush1.bf16.msra.mxu0 %v474
    %508 = vmatprep.subr.bf16.mxu0 %v477
    %509 = vmatpush1.bf16.msra.mxu0 %v476
    %510 = vmatprep.subr.bf16.mxu0 %v479
    %511 = vmatpush1.bf16.msra.mxu0 %v478
    %512 = vmatprep.subr.bf16.mxu0 %v481
    %513 = vmatpush1.bf16.msra.mxu0 %v480
    %514 = vmatprep.subr.bf16.mxu0 0
    %515 = vmatpush1.bf16.msra.mxu0 0
    %516 = vmatprep.subr.bf16.mxu0 0
    %517 = vmatpush1.bf16.msra.mxu0 0
    %518 = vmatprep.subr.bf16.mxu0 0
    %519 = vmatpush1.bf16.msra.mxu0 0
    %520 = vmatprep.subr.bf16.mxu0 0
    %521 = vmatpush1.bf16.msra.mxu0 0
    %522 = vmatprep.subr.bf16.mxu0 0
    %523 = vmatpush1.bf16.msra.mxu0 0
    %524 = vmatprep.subr.bf16.mxu0 0
    %525 = vmatpush1.bf16.msra.mxu0 0
    %526 = vmatprep.subr.bf16.mxu0 0
    %527 = vmatpush1.bf16.msra.mxu0 0
    %528 = vmatprep.subr.bf16.mxu0 0
    %529 = vmatpush1.bf16.msra.mxu0 0
    %530 = vmatprep.mubr.bf16.mxu0 0
    %531 = vmatmul.mubr.bf16.gmra.mrb[0].mxu0 %v401
    %v532 = vpop.f32.mrb[0].mxu0
    %v533 = vadd.f32 0.0, %v532
    %v534 = vpop.f32.mrb[0].mxu0
    %v535 = vadd.f32 0.0, %v534
    %v536 = vpop.f32.mrb[0].mxu0
    %v537 = vpop.f32.mrb[0].mxu0
    %538 = vdwg.mxu0
    %v539 = vrot.slane %v533, 4
    %v540 = vadd.f32 %v533, %v539
    %v541 = vrot.slane %v540, 2
    %v542 = vadd.f32 %v540, %v541
    %v543 = vrot.slane %v542, 1
    %v544 = vadd.f32 %v542, %v543
    %v545 = vrot.slane %v535, 4
    %v546 = vadd.f32 %v535, %v545
    %v547 = vrot.slane %v546, 2
    %v548 = vadd.f32 %v546, %v547
    %v549 = vrot.slane %v548, 1
    %v550 = vadd.f32 %v548, %v549
    %v551 = vmul.f32 %v533, %v533
    %v552 = vmul.f32 %v535, %v535
    %v553 = vrot.slane %v551, 4
    %v554 = vadd.f32 %v551, %v553
    %v555 = vrot.slane %v554, 2
    %v556 = vadd.f32 %v554, %v555
    %v557 = vrot.slane %v556, 1
    %v558 = vadd.f32 %v556, %v557
    %v559 = vrot.slane %v552, 4
    %v560 = vadd.f32 %v552, %v559
    %v561 = vrot.slane %v560, 2
    %v562 = vadd.f32 %v560, %v561
    %v563 = vrot.slane %v562, 1
    %v564 = vadd.f32 %v562, %v563
    %v565 = vmul.f32 %v544, 0.125
    %v566 = vmul.f32 %v550, 0.125
    %v567 = vmul.f32 %v558, 0.125
    %v568 = vmul.f32 %v564, 0.125
    %v569 = vmul.f32 %v565, %v565
    %v570 = vmul.f32 %v566, %v566
    %v571 = vsub.f32 %v567, %v569
    %v572 = vsub.f32 %v568, %v570
    %v573 = vmax.f32 %v571, 0.0
    %v574 = vmax.f32 %v572, 0.0
    %v575 = vld [vmem:[%s8] sm:$0x3]
    %v576 = vadd.f32 %v573, 1e-05
    %v577 = vadd.f32 %v574, 1e-05
    %v578 = vrsqrt.pop %v576
    %v579 = vrsqrt.pop %v577
    %v582 = vcombine.low %v578, %v579
    %v584 = vunpack.c.l.s4 1966171168
    %v585 = vunpack.c.0.s8 %v584
    %v586 = vlaneseq
    %v587 = vshrl.u32 %v586, 7
    %v588 = vsub.s32 %v585, %v587
    %v589 = vrot.slane %v582, %v588
    %v591 = vunpack.c.l.s4 1966171168
    %v592 = vunpack.c.0.s8 %v591
    %v593 = vlaneseq
    %v594 = vshrl.u32 %v593, 7
    %v595 = vsub.s32 %v592, %v594
    %v596 = vrot.slane %v589, %v595
    %v598 = vmul.f32 %v575, %v596
    %v599 = vld [vmem:[%s9] sm:$0x3]
    %v601 = vlaneseq
    %v602 = vshrl.u32 %v601, 7
    %v603 = vsub.s32 0, %v602
    %v604 = vrot.slane %v598, %v603
    %v605 = vlaneseq
    %v606 = vshrl.u32 %v605, 7
    %v607 = vsub.s32 1, %v606
    %v608 = vrot.slane %v598, %v607
    %v611 = vmul.f32 %v565, %v604
    %v612 = vmul.f32 %v566, %v608
    %v615 = vcombine.low %v611, %v612
    %v617 = vunpack.c.l.s4 1966171168
    %v618 = vunpack.c.0.s8 %v617
    %v619 = vlaneseq
    %v620 = vshrl.u32 %v619, 7
    %v621 = vsub.s32 %v618, %v620
    %v622 = vrot.slane %v615, %v621
    %v624 = vunpack.c.l.s4 1966171168
    %v625 = vunpack.c.0.s8 %v624
    %v626 = vlaneseq
    %v627 = vshrl.u32 %v626, 7
    %v628 = vsub.s32 %v625, %v627
    %v629 = vrot.slane %v622, %v628
    %v631 = vsub.f32 %v599, %v629
    %v632 = vmul.f32 %v533, %v604
    %v633 = vmul.f32 %v535, %v608
    %v635 = vlaneseq
    %v636 = vshrl.u32 %v635, 7
    %v637 = vsub.s32 0, %v636
    %v638 = vrot.slane %v631, %v637
    %v639 = vlaneseq
    %v640 = vshrl.u32 %v639, 7
    %v641 = vsub.s32 1, %v640
    %v642 = vrot.slane %v631, %v641
    %v645 = vadd.f32 %v632, %v638
    %v646 = vadd.f32 %v633, %v642
    %v647 = vmul.f32 %v645, 0.01
    %v648 = vmul.f32 %v646, 0.01
    %v649 = vmax.f32 %v645, %v647
    %v650 = vmax.f32 %v646, %v648
    %v651 = vpack.c.bf16 %v649, %v649
    %v652 = vpack.c.bf16 %v650, %v650
    %v653 = vld [vmem:[#allocation10] sm:$0xf]
    %v654 = vld [vmem:[#allocation10 + $0x4] sm:$0xf]
    %v655 = vld [vmem:[#allocation10 + $0x8] sm:$0xf]
    %v656 = vld [vmem:[#allocation10 + $0xc] sm:$0xf]
    %v657 = vld [vmem:[#allocation10 + $0x10] sm:$0xf]
    %v658 = vld [vmem:[#allocation10 + $0x14] sm:$0xf]
    %v659 = vld [vmem:[#allocation10 + $0x18] sm:$0xf]
    %v660 = vld [vmem:[#allocation10 + $0x1c] sm:$0xf]
    %v661 = vld [vmem:[#allocation10 + $0x20] sm:$0xf]
    %v662 = vld [vmem:[#allocation10 + $0x24] sm:$0xf]
    %v663 = vld [vmem:[#allocation10 + $0x28] sm:$0xf]
    %v664 = vld [vmem:[#allocation10 + $0x2c] sm:$0xf]
    %v665 = vld [vmem:[#allocation10 + $0x30] sm:$0xf]
    %v666 = vld [vmem:[#allocation10 + $0x34] sm:$0xf]
    %v667 = vld [vmem:[#allocation10 + $0x38] sm:$0xf]
    %v668 = vld [vmem:[#allocation10 + $0x3c] sm:$0xf]
    %v669 = vld [vmem:[#allocation10 + $0x40] sm:$0xf]
    %v670 = vld [vmem:[#allocation10 + $0x44] sm:$0xf]
    %v671 = vld [vmem:[#allocation10 + $0x48] sm:$0xf]
    %v672 = vld [vmem:[#allocation10 + $0x4c] sm:$0xf]
    %v673 = vld [vmem:[#allocation10 + $0x50] sm:$0xf]
    %v674 = vld [vmem:[#allocation10 + $0x54] sm:$0xf]
    %v675 = vld [vmem:[#allocation10 + $0x58] sm:$0xf]
    %v676 = vld [vmem:[#allocation10 + $0x5c] sm:$0xf]
    %v677 = vld [vmem:[#allocation10 + $0x60] sm:$0xf]
    %v678 = vld [vmem:[#allocation10 + $0x64] sm:$0xf]
    %v679 = vld [vmem:[#allocation10 + $0x68] sm:$0xf]
    %v680 = vld [vmem:[#allocation10 + $0x6c] sm:$0xf]
    %v681 = vld [vmem:[#allocation10 + $0x70] sm:$0xf]
    %v682 = vld [vmem:[#allocation10 + $0x74] sm:$0xf]
    %v683 = vld [vmem:[#allocation10 + $0x78] sm:$0xf]
    %v684 = vld [vmem:[#allocation10 + $0x7c] sm:$0xf]
    %v685 = vld [vmem:[%s11] sm:$0x1]
    %v687 = vlaneseq
    %v688 = vshrl.u32 %v687, 7
    %v689 = vsub.s32 0, %v688
    %v690 = vrot.slane %v685, %v689
    %v724 = vunpack.c.l.b16 %v653
    %v725 = vunpack.c.l.b16 %v654
    %v726 = vunpack.c.l.b16 %v655
    %v727 = vunpack.c.l.b16 %v656
    %v728 = vunpack.c.l.b16 %v657
    %v729 = vunpack.c.l.b16 %v658
    %v730 = vunpack.c.l.b16 %v659
    %v731 = vunpack.c.l.b16 %v660
    %v732 = vunpack.c.l.b16 %v661
    %v733 = vunpack.c.l.b16 %v662
    %v734 = vunpack.c.l.b16 %v663
    %v735 = vunpack.c.l.b16 %v664
    %v736 = vunpack.c.l.b16 %v665
    %v737 = vunpack.c.l.b16 %v666
    %v738 = vunpack.c.l.b16 %v667
    %v739 = vunpack.c.l.b16 %v668
    %v740 = vunpack.c.l.b16 %v669
    %v741 = vunpack.c.l.b16 %v670
    %v742 = vunpack.c.l.b16 %v671
    %v743 = vunpack.c.l.b16 %v672
    %v744 = vunpack.c.l.b16 %v673
    %v745 = vunpack.c.l.b16 %v674
    %v746 = vunpack.c.l.b16 %v675
    %v747 = vunpack.c.l.b16 %v676
    %v748 = vunpack.c.l.b16 %v677
    %v749 = vunpack.c.l.b16 %v678
    %v750 = vunpack.c.l.b16 %v679
    %v751 = vunpack.c.l.b16 %v680
    %v752 = vunpack.c.l.b16 %v681
    %v753 = vunpack.c.l.b16 %v682
    %v754 = vunpack.c.l.b16 %v683
    %v755 = vunpack.c.l.b16 %v684
    %v756 = vpack.c.b16 %v725, %v724
    %v757 = vpack.c.b16 %v727, %v726
    %v758 = vpack.c.b16 %v729, %v728
    %v759 = vpack.c.b16 %v731, %v730
    %v760 = vpack.c.b16 %v733, %v732
    %v761 = vpack.c.b16 %v735, %v734
    %v762 = vpack.c.b16 %v737, %v736
    %v763 = vpack.c.b16 %v739, %v738
    %v764 = vpack.c.b16 %v741, %v740
    %v765 = vpack.c.b16 %v743, %v742
    %v766 = vpack.c.b16 %v745, %v744
    %v767 = vpack.c.b16 %v747, %v746
    %v768 = vpack.c.b16 %v749, %v748
    %v769 = vpack.c.b16 %v751, %v750
    %v770 = vpack.c.b16 %v753, %v752
    %v771 = vpack.c.b16 %v755, %v754
    %788 = vmatprep.subr.bf16.mxu0 0
    %789 = vmatpush1.bf16.msra.mxu0 %v756
    %790 = vmatprep.subr.bf16.mxu0 0
    %791 = vmatpush1.bf16.msra.mxu0 %v757
    %792 = vmatprep.subr.bf16.mxu0 0
    %793 = vmatpush1.bf16.msra.mxu0 %v758
    %794 = vmatprep.subr.bf16.mxu0 0
    %795 = vmatpush1.bf16.msra.mxu0 %v759
    %796 = vmatprep.subr.bf16.mxu0 0
    %797 = vmatpush1.bf16.msra.mxu0 %v760
    %798 = vmatprep.subr.bf16.mxu0 0
    %799 = vmatpush1.bf16.msra.mxu0 %v761
    %800 = vmatprep.subr.bf16.mxu0 0
    %801 = vmatpush1.bf16.msra.mxu0 %v762
    %802 = vmatprep.subr.bf16.mxu0 0
    %803 = vmatpush1.bf16.msra.mxu0 %v763
    %804 = vmatprep.subr.bf16.mxu0 0
    %805 = vmatpush1.bf16.msra.mxu0 %v764
    %806 = vmatprep.subr.bf16.mxu0 0
    %807 = vmatpush1.bf16.msra.mxu0 %v765
    %808 = vmatprep.subr.bf16.mxu0 0
    %809 = vmatpush1.bf16.msra.mxu0 %v766
    %810 = vmatprep.subr.bf16.mxu0 0
    %811 = vmatpush1.bf16.msra.mxu0 %v767
    %812 = vmatprep.subr.bf16.mxu0 0
    %813 = vmatpush1.bf16.msra.mxu0 %v768
    %814 = vmatprep.subr.bf16.mxu0 0
    %815 = vmatpush1.bf16.msra.mxu0 %v769
    %816 = vmatprep.subr.bf16.mxu0 0
    %817 = vmatpush1.bf16.msra.mxu0 %v770
    %818 = vmatprep.subr.bf16.mxu0 0
    %819 = vmatpush1.bf16.msra.mxu0 %v771
    %820 = vmatprep.mubr.bf16.mxu0 %v652
    %821 = vmatmul.mubr.bf16.gmra.mrb[0].mxu0 %v651
    %v822 = vpop.f32.mrb[0].mxu0
    %v823 = vadd.f32 %v690, %v822
    %v824 = vpop.f32.mrb[0].mxu0
    %v825 = vpop.f32.mrb[0].mxu0
    %v826 = vpop.f32.mrb[0].mxu0
    %827 = vdwg.mxu0
    %828 = vst [vmem:[#allocation11] sm:$0xff] %v823
    // Predicated region
    $region70: #{tpu_custom_call.1} parent=1 // pred_check
      _
    $region71: #{tpu_custom_call.1} parent=1 // pred_check_branch
      %830 = sbr.rel (0) target = $region73
    $region72: #{tpu_custom_call.1} parent=1 // pred_region
      %s832 = ssub.s32 128, 128
      %833 = vsyncadd [#allocation4], %s832
      %s835 = sshll.u32 [#allocation11], 4
      %s836 = int_to_ptr.vmem [resolvable:$true] %s835
      %838 = dma.vmem_to_hbm [thread:$0]  %s836, 128, %s12, [#allocation4]
    $region73: #{tpu_custom_call.1} parent=1 // pred_fallthru
      _
    // Predicated region
    $region74: #{tpu_custom_call.1} parent=1 // pred_check
      _
    $region75: #{tpu_custom_call.1} parent=1 // pred_check_branch
      %840 = sbr.rel (0) target = $region77
    $region76: #{tpu_custom_call.1} parent=1 // pred_region
      %841 = dma.done [#allocation4], 128
    $region77: #{tpu_custom_call.1} parent=1 // pred_fallthru
      _
    %842 = vsyncpa [#allocation3], 1
    %843 = vsyncpa [#allocation6], 1
    %844 = vsyncpa [#allocation9], 1
    %845 = vsyncpa [#allocation4], 1

</llo_original>
